<compile_context>
chip_gen: v7x
topology: tpu7x:2x2x1
jax: 0.10.0
libtpu: 0.0.40
codegen_flags: <defaults>
</compile_context>

<pallas_src>
import functools

import jax
import jax.numpy as jnp
from jax.experimental import pallas as pl
from jax.experimental.pallas import tpu as pltpu


def _round_up(x, m):
    return ((x + m - 1) // m) * m


def _vmem_capacity_bytes(default=64 * 1024 * 1024):
    """Best-effort query of per-core VMEM; conservative 64 MiB fallback."""
    try:
        info = pltpu.get_tpu_info()
        cap = getattr(info, "vmem_capacity_bytes", None)
        if cap:
            return int(cap)
    except Exception:
        pass
    return default


def _pick_row_tile(n_rows, h, in_itemsize, out_itemsize, vmem_bytes):
    """Largest row tile (multiple of 8 sublanes) whose double-buffered
    input+output tiles fit in ~half of VMEM (rest: A/B, mean, headroom)."""
    bytes_per_row = h * (in_itemsize + out_itemsize)
    budget = vmem_bytes // 2
    tn = budget // (2 * max(bytes_per_row, 1))     # 2 buffers each (in + out)
    tn = max(8, min(1024, (tn // 8) * 8))
    tn = min(tn, _round_up(n_rows, 8))             # never bigger than the problem
    return int(tn)


def _lora_kv_kernel(x_ref, a_ref, b_ref, out_ref, mean_ref, *, inv_n):
    """One grid step: one KV slice (keys or values), one row tile.

    x_ref:    [TN, H]  input rows (native dtype)
    a_ref:    [H, R]   LoRA down-projection (VMEM-resident across row tiles)
    b_ref:    [R, H]   LoRA up-projection, pre-scaled by alpha/rank
    out_ref:  [TN, H]  x + (x @ A) @ B_scaled
    mean_ref: [1, H]   f32 column-mean accumulator (finalized on last row tile)
    """
    i = pl.program_id(1)
    n_row_tiles = pl.num_programs(1)

    x = x_ref[...]                                                        # native dtype
    xa = jnp.dot(x, a_ref[...], preferred_element_type=jnp.float32)      # [TN, R] (MXU)
    delta = jnp.dot(xa, b_ref[...], preferred_element_type=jnp.float32)  # [TN, H] (MXU)
    out_ref[...] = (x.astype(jnp.float32) + delta).astype(out_ref.dtype)

    # Partial column sum of this row tile (f32 accumulation, XLU sublane reduce).
    part = jnp.sum(x, axis=0, keepdims=True, dtype=jnp.float32)          # [1, H]

    @pl.when(i == 0)
    def _():
        mean_ref[...] = jnp.zeros_like(mean_ref)

    mean_ref[...] += part

    @pl.when(i == n_row_tiles - 1)
    def _():
        mean_ref[...] = mean_ref[...] * inv_n


def _lora_kv_forward(x, lora_a, lora_b_scaled, *, true_n, row_tile, vmem_limit):
    """x: [2, Np, H]; lora_a: [2, H, R]; lora_b_scaled: [2, R, H]."""
    _, n_pad, h = x.shape
    r = lora_a.shape[-1]
    n_row_tiles = n_pad // row_tile

    kernel = functools.partial(_lora_kv_kernel, inv_n=1.0 / float(true_n))

    out, mean = pl.pallas_call(
        kernel,
        out_shape=(
            jax.ShapeDtypeStruct((2, n_pad, h), x.dtype),
            jax.ShapeDtypeStruct((2, 1, h), jnp.float32),
        ),
        grid=(2, n_row_tiles),
        in_specs=[
            pl.BlockSpec((None, row_tile, h), lambda kv, i: (kv, i, 0)),
            pl.BlockSpec((None, h, r), lambda kv, i: (kv, 0, 0)),
            pl.BlockSpec((None, r, h), lambda kv, i: (kv, 0, 0)),
        ],
        out_specs=(
            pl.BlockSpec((None, row_tile, h), lambda kv, i: (kv, i, 0)),
            pl.BlockSpec((None, 1, h), lambda kv, i: (kv, 0, 0)),
        ),
        compiler_params=pltpu.CompilerParams(
            dimension_semantics=("parallel", "arbitrary"),
            vmem_limit_bytes=int(vmem_limit),
        ),
    )(x, lora_a, lora_b_scaled)
    return out, mean


def lora_compressor_forward(keys, values, params, *, rank, alpha):
    """Forward pass of LoRACompressor.

    keys, values: [batch, seq, hidden]
    params: dict with 'key_lora_A' [H,R], 'key_lora_B' [R,H],
            'value_lora_A' [H,R], 'value_lora_B' [R,H]
    Returns (compressed_keys, compressed_values, key_cache, value_cache).
    """
    b, s, h = keys.shape
    n = b * s
    scaling = float(alpha) / float(rank)

    # Stack keys/values along a leading KV axis so one pallas_call handles both.
    x = jnp.stack([keys.reshape(n, h), values.reshape(n, h)], axis=0)       # [2, N, H]
    lora_a = jnp.stack([params["key_lora_A"], params["value_lora_A"]], 0)   # [2, H, R]
    lora_b = jnp.stack([params["key_lora_B"], params["value_lora_B"]], 0)   # [2, R, H]
    # Fold alpha/rank into B once (tiny [R,H] op in the wrapper).
    lora_b = (lora_b.astype(jnp.float32) * scaling).astype(lora_b.dtype)

    vmem_bytes = _vmem_capacity_bytes()
    row_tile = _pick_row_tile(n, h, x.dtype.itemsize, x.dtype.itemsize, vmem_bytes)
    n_pad = _round_up(n, row_tile)
    if n_pad != n:
        # Zero rows contribute zero delta and zero column-sum; sliced off below.
        x = jnp.pad(x, ((0, 0), (0, n_pad - n), (0, 0)))

    vmem_limit = min(vmem_bytes * 3 // 4, 112 * 1024 * 1024)

    out, mean = _lora_kv_forward(
        x, lora_a, lora_b, true_n=n, row_tile=row_tile, vmem_limit=vmem_limit
    )

    compressed_keys = out[0, :n, :].reshape(b, s, h)
    compressed_values = out[1, :n, :].reshape(b, s, h)
    key_cache = mean[0]     # [1, H]
    value_cache = mean[1]   # [1, H]
    return compressed_keys, compressed_values, key_cache, value_cache


def _init_params(key, hidden_size, rank):
    """Deterministic parameter init (shapes match the PyTorch module).

    The PyTorch module zero-inits *_lora_B (so delta == 0 at init); here B gets
    small nonzero values so the matmul path is exercised. A uses a
    kaiming-uniform-like bound as in the module.
    """
    k1, k2, k3, k4 = jax.random.split(key, 4)
    bound = 1.0 / jnp.sqrt(hidden_size)
    return {
        "key_lora_A": jax.random.uniform(
            k1, (hidden_size, rank), jnp.float32, -bound, bound
        ),
        "key_lora_B": 0.01 * jax.random.normal(k2, (rank, hidden_size), jnp.float32),
        "value_lora_A": jax.random.uniform(
            k3, (hidden_size, rank), jnp.float32, -bound, bound
        ),
        "value_lora_B": 0.01 * jax.random.normal(k4, (rank, hidden_size), jnp.float32),
    }


if __name__ == "__main__":
    # Small shapes consistent with the module's forward: [batch, seq, hidden]
    batch, seq, hidden, rank, alpha = 2, 8, 32, 8, 16.0

    root = jax.random.PRNGKey(0)
    k_keys, k_vals, k_params = jax.random.split(root, 3)

    keys = jax.random.normal(k_keys, (batch, seq, hidden), jnp.float32)
    values = jax.random.normal(k_vals, (batch, seq, hidden), jnp.float32)
    params = _init_params(k_params, hidden, rank)

    # TODO(synk): dropout with p>0 (training mode) not implemented; module default p=0.0 is identity.

    ck, cv, key_cache, value_cache = lora_compressor_forward(
        keys, values, params, rank=rank, alpha=alpha
    )
    jax.block_until_ready((ck, cv, key_cache, value_cache))

    # Reference check in plain JAX.
    scaling = alpha / rank
    kf = keys.reshape(-1, hidden)
    vf = values.reshape(-1, hidden)
    ck_ref = (kf + (kf @ params["key_lora_A"]) @ params["key_lora_B"] * scaling).reshape(
        batch, seq, hidden
    )
    cv_ref = (
        vf + (vf @ params["value_lora_A"]) @ params["value_lora_B"] * scaling
    ).reshape(batch, seq, hidden)
    kc_ref = kf.mean(axis=0, keepdims=True)
    vc_ref = vf.mean(axis=0, keepdims=True)

    assert jnp.allclose(ck, ck_ref, atol=1e-5, rtol=1e-5)
    assert jnp.allclose(cv, cv_ref, atol=1e-5, rtol=1e-5)
    assert jnp.allclose(key_cache, kc_ref, atol=1e-5, rtol=1e-5)
    assert jnp.allclose(value_cache, vc_ref, atol=1e-5, rtol=1e-5)

    print("KERNEL_OK")
</pallas_src>

<mosaic_0001>
module attributes {stable_mosaic.version = 11 : i64} {
  func.func @_lora_kv_kernel(%arg0: i32, %arg1: i32, %arg2: memref<1x16x32xf32, #tpu.memory_space<vmem>>, %arg3: memref<1x32x8xf32, #tpu.memory_space<vmem>>, %arg4: memref<1x8x32xf32, #tpu.memory_space<vmem>>, %arg5: memref<1x16x32xf32, #tpu.memory_space<vmem>>, %arg6: memref<1x1x32xf32, #tpu.memory_space<vmem>>) attributes {dimension_semantics = [#tpu.dimension_semantics<parallel>, #tpu.dimension_semantics<arbitrary>], iteration_bounds = array<i64: 2, 1>, scalar_prefetch = 0 : i64, scratch_operands = 0 : i64, tpu.core_type = #tpu.core_type<tc>, window_params = [{transform_indices = @transform_0, window_bounds = array<i64: 1, 16, 32>}, {transform_indices = @transform_1, window_bounds = array<i64: 1, 32, 8>}, {transform_indices = @transform_2, window_bounds = array<i64: 1, 8, 32>}, {transform_indices = @transform_3, window_bounds = array<i64: 1, 16, 32>}, {transform_indices = @transform_4, window_bounds = array<i64: 1, 1, 32>}]} {
    %c0 = arith.constant 0 : index
    %c0_0 = arith.constant 0 : index
    %c0_1 = arith.constant 0 : index
    %0 = vector.load %arg2[%c0, %c0_0, %c0_1] : memref<1x16x32xf32, #tpu.memory_space<vmem>>, vector<1x16x32xf32>
    %1 = vector.shape_cast %0 : vector<1x16x32xf32> to vector<16x32xf32>
    %c0_2 = arith.constant 0 : index
    %c0_3 = arith.constant 0 : index
    %c0_4 = arith.constant 0 : index
    %2 = vector.load %arg3[%c0_2, %c0_3, %c0_4] : memref<1x32x8xf32, #tpu.memory_space<vmem>>, vector<1x32x8xf32>
    %3 = vector.shape_cast %2 : vector<1x32x8xf32> to vector<32x8xf32>
    %cst = arith.constant dense<0.000000e+00> : vector<16x8xf32>
    %4 = tpu.matmul %1, %3, %cst {dimension_numbers = #tpu.dot_dimension_numbers<[1], [0], [0], [1], [0, 0, 1, 1], [], []>} : vector<16x32xf32>, vector<32x8xf32>, vector<16x8xf32> -> vector<16x8xf32>
    %c0_5 = arith.constant 0 : index
    %c0_6 = arith.constant 0 : index
    %c0_7 = arith.constant 0 : index
    %5 = vector.load %arg4[%c0_5, %c0_6, %c0_7] : memref<1x8x32xf32, #tpu.memory_space<vmem>>, vector<1x8x32xf32>
    %6 = vector.shape_cast %5 : vector<1x8x32xf32> to vector<8x32xf32>
    %cst_8 = arith.constant dense<0.000000e+00> : vector<16x32xf32>
    %7 = tpu.matmul %4, %6, %cst_8 {dimension_numbers = #tpu.dot_dimension_numbers<[1], [0], [0], [1], [0, 0, 1, 1], [], []>} : vector<16x8xf32>, vector<8x32xf32>, vector<16x32xf32> -> vector<16x32xf32>
    %8 = arith.addf %1, %7 : vector<16x32xf32>
    %c0_9 = arith.constant 0 : index
    %c0_10 = arith.constant 0 : index
    %c0_11 = arith.constant 0 : index
    %9 = vector.load %arg5[%c0_9, %c0_10, %c0_11] : memref<1x16x32xf32, #tpu.memory_space<vmem>>, vector<1x16x32xf32>
    %10 = vector.shape_cast %9 : vector<1x16x32xf32> to vector<16x32xf32>
    %11 = vector.shape_cast %8 : vector<16x32xf32> to vector<1x16x32xf32>
    tpu.vector_store %arg5[%c0_9, %c0_10, %c0_11], %11 {strides = array<i32>} : memref<1x16x32xf32, #tpu.memory_space<vmem>>, vector<1x16x32xf32>,
    %cst_12 = arith.constant dense<0.000000e+00> : vector<32xf32>
    %12 = vector.multi_reduction <add>, %1, %cst_12 [0] : vector<16x32xf32> to vector<32xf32>
    %13 = vector.shape_cast %12 : vector<32xf32> to vector<1x32xf32>
    %c0_i32 = arith.constant 0 : i32
    %14 = arith.cmpi eq, %arg1, %c0_i32 : i32
    %15 = arith.extui %14 : i1 to i32
    %c0_i32_13 = arith.constant 0 : i32
    %16 = arith.cmpi ne, %15, %c0_i32_13 : i32
    scf.if %16 {
      %cst_22 = arith.constant 0.000000e+00 : f32
      %26 = vector.broadcast %cst_22 : f32 to vector<1x32xf32>
      %c0_23 = arith.constant 0 : index
      %c0_24 = arith.constant 0 : index
      %c0_25 = arith.constant 0 : index
      %27 = vector.load %arg6[%c0_23, %c0_24, %c0_25] : memref<1x1x32xf32, #tpu.memory_space<vmem>>, vector<1x1x32xf32>
      %28 = vector.shape_cast %27 : vector<1x1x32xf32> to vector<1x32xf32>
      %29 = vector.shape_cast %26 : vector<1x32xf32> to vector<1x1x32xf32>
      tpu.vector_store %arg6[%c0_23, %c0_24, %c0_25], %29 {strides = array<i32>} : memref<1x1x32xf32, #tpu.memory_space<vmem>>, vector<1x1x32xf32>,
    } else {
    }
    %c0_14 = arith.constant 0 : index
    %c0_15 = arith.constant 0 : index
    %c0_16 = arith.constant 0 : index
    %17 = vector.load %arg6[%c0_14, %c0_15, %c0_16] : memref<1x1x32xf32, #tpu.memory_space<vmem>>, vector<1x1x32xf32>
    %18 = vector.shape_cast %17 : vector<1x1x32xf32> to vector<1x32xf32>
    %19 = arith.addf %18, %13 : vector<1x32xf32>
    %c0_17 = arith.constant 0 : index
    %c0_18 = arith.constant 0 : index
    %c0_19 = arith.constant 0 : index
    %20 = vector.load %arg6[%c0_17, %c0_18, %c0_19] : memref<1x1x32xf32, #tpu.memory_space<vmem>>, vector<1x1x32xf32>
    %21 = vector.shape_cast %20 : vector<1x1x32xf32> to vector<1x32xf32>
    %22 = vector.shape_cast %19 : vector<1x32xf32> to vector<1x1x32xf32>
    tpu.vector_store %arg6[%c0_17, %c0_18, %c0_19], %22 {strides = array<i32>} : memref<1x1x32xf32, #tpu.memory_space<vmem>>, vector<1x1x32xf32>,
    %c0_i32_20 = arith.constant 0 : i32
    %23 = arith.cmpi eq, %arg1, %c0_i32_20 : i32
    %24 = arith.extui %23 : i1 to i32
    %c0_i32_21 = arith.constant 0 : i32
    %25 = arith.cmpi ne, %24, %c0_i32_21 : i32
    scf.if %25 {
      %c0_22 = arith.constant 0 : index
      %c0_23 = arith.constant 0 : index
      %c0_24 = arith.constant 0 : index
      %26 = vector.load %arg6[%c0_22, %c0_23, %c0_24] : memref<1x1x32xf32, #tpu.memory_space<vmem>>, vector<1x1x32xf32>
      %27 = vector.shape_cast %26 : vector<1x1x32xf32> to vector<1x32xf32>
      %cst_25 = arith.constant 6.250000e-02 : f32
      %28 = vector.broadcast %cst_25 : f32 to vector<1x32xf32>
      %29 = arith.mulf %27, %28 : vector<1x32xf32>
      %c0_26 = arith.constant 0 : index
      %c0_27 = arith.constant 0 : index
      %c0_28 = arith.constant 0 : index
      %30 = vector.load %arg6[%c0_26, %c0_27, %c0_28] : memref<1x1x32xf32, #tpu.memory_space<vmem>>, vector<1x1x32xf32>
      %31 = vector.shape_cast %30 : vector<1x1x32xf32> to vector<1x32xf32>
      %32 = vector.shape_cast %29 : vector<1x32xf32> to vector<1x1x32xf32>
      tpu.vector_store %arg6[%c0_26, %c0_27, %c0_28], %32 {strides = array<i32>} : memref<1x1x32xf32, #tpu.memory_space<vmem>>, vector<1x1x32xf32>,
    } else {
    }
    return
  }
  func.func @transform_0(%arg0: i32, %arg1: i32) -> (i32, i32, i32) {
    %c0_i32 = arith.constant 0 : i32
    %c0_i32_0 = arith.constant 0 : i32
    return %arg0, %arg1, %c0_i32 : i32, i32, i32
  }
  func.func @transform_1(%arg0: i32, %arg1: i32) -> (i32, i32, i32) {
    %c0_i32 = arith.constant 0 : i32
    %c0_i32_0 = arith.constant 0 : i32
    %c0_i32_1 = arith.constant 0 : i32
    return %arg0, %c0_i32, %c0_i32_0 : i32, i32, i32
  }
  func.func @transform_2(%arg0: i32, %arg1: i32) -> (i32, i32, i32) {
    %c0_i32 = arith.constant 0 : i32
    %c0_i32_0 = arith.constant 0 : i32
    %c0_i32_1 = arith.constant 0 : i32
    return %arg0, %c0_i32, %c0_i32_0 : i32, i32, i32
  }
  func.func @transform_3(%arg0: i32, %arg1: i32) -> (i32, i32, i32) {
    %c0_i32 = arith.constant 0 : i32
    %c0_i32_0 = arith.constant 0 : i32
    return %arg0, %arg1, %c0_i32 : i32, i32, i32
  }
  func.func @transform_4(%arg0: i32, %arg1: i32) -> (i32, i32, i32) {
    %c0_i32 = arith.constant 0 : i32
    %c0_i32_0 = arith.constant 0 : i32
    %c0_i32_1 = arith.constant 0 : i32
    return %arg0, %c0_i32, %c0_i32_0 : i32, i32, i32
  }
}

</mosaic_0001>

<llo_original>
// kernel: tpu_custom_call.1
$region0: #{tpu_custom_call.1}
  #allocation0 [shape = 'u32[]', space=smem, size = 0x4, offset = 0x4, fixed_abs, tag = 'smem constant byte address 0x4 - core index']
  #allocation1 [shape = 'u32[144,128]{1,0:T(1,128)}', space=vmem, size = 0x12000, scoped, tag = 'internal scratch']
  %s0 = inlined_call_operand.vmem [shape: f32[2,16,32], index: 0, kind: input, shape index: {}]
  %s1 = inlined_call_operand.vmem [shape: f32[2,32,8], index: 1, kind: input, shape index: {}]
  %s2 = inlined_call_operand.vmem [shape: f32[2,8,32], index: 2, kind: input, shape index: {}]
  %s3 = inlined_call_operand.hbm [shape: f32[2,16,32], index: 3, kind: output, shape index: {0}]
  %s4 = inlined_call_operand.hbm [shape: f32[2,1,32], index: 4, kind: output, shape index: {1}]
  %5 = xla_tuple %s3, %s4
  %s6 = sld [smem:[#allocation0]]
  $region61: #{tpu_custom_call.1} parent=0
    _
  %s8 = ssub.s32 1, %s6
  %s9 = scalar_select 0, %s8, %s6
  $region1: #{tpu_custom_call.1} parent=0
    #allocation2 [shape = 'u8[16384]{0}', space=vmem, size = 0x4000, scoped, tag = 'output window, operand 0']
    #allocation3 [shape = 's32[2]{0}', space=sflag, size = 0x8, scoped, tag = 'scoped memory for tpu_custom_call.1']
    #allocation4 [shape = 'u8[1024]{0}', space=vmem, size = 0x400, scoped, tag = 'output window, operand 1']
    #allocation5 [shape = 's32[2]{0}', space=sflag, size = 0x8, scoped, tag = 'scoped memory for tpu_custom_call.1']
    %10 = vsyncpa [#allocation3], 0
    %s11 = scalar_lea.sflag [#allocation3], 1
    %12 = vsyncpa %s11, 0
    %13 = vsyncpa [#allocation5], 0
    %s14 = scalar_lea.sflag [#allocation5], 1
    %15 = vsyncpa %s14, 0
    loop: start=0, step=1, limit=4
    $region2: #{tpu_custom_call.1} parent=1 // loop_pre_header
      _
    $region3: #{tpu_custom_call.1} parent=1 // loop_header
      %s17 = sphi 0, %s21
      %p18 = scmp.ge.s32.totalorder %s17, 4
      %s24 = sphi 0, %s36
      %s25 = sphi 0, %s32
      %s26 = sphi 0, %s24
      %s27 = sphi 0, %s25
      %s28 = sphi 0, %s26
      %s29 = sphi 0, %s27
      %s41 = sphi 0, %s43
      %s44 = sphi 0, %s41
      %s45 = sphi 0, %s44
      %s61 = sphi 0, %s45
      %s67 = sphi 0, %s69
      %s70 = sphi 0, %s67
      %s71 = sphi 0, %s70
      %s87 = sphi 0, %s71
      %s93 = sphi 0, %s95
      %s96 = sphi 0, %s93
      %s97 = sphi 0, %s96
      %s113 = sphi 0, %s97
      %s121 = sphi 0, %s123
      %s124 = sphi 0, %s121
      %s125 = sphi 0, %s124
      %s141 = sphi 0, %s125
      %s147 = sphi 0, %s149
      %s150 = sphi 0, %s147
      %s151 = sphi 0, %s150
      %s167 = sphi 0, %s151
    $region4: #{tpu_custom_call.1} parent=1 // loop_header_branch
      %20 = sbr.rel (%p18) target = $region8
    $region5: #{tpu_custom_call.1} parent=1 // loop_body
      %s22 = ssub.s32 %s17, 1
      %s23 = ssub.s32 %s17, 2
      %s30 = sadd.s32 1, %s25
      %p31 = scmp.ge.s32.totalorder %s30, 1
      %s32 = scalar_select %p31, 0, %s30
      %s33 = sadd.s32 1, %s24
      %s34 = scalar_select %p31, %s33, %s24
      %p35 = scmp.ge.s32.totalorder %s34, 2
      %s36 = scalar_select %p35, 0, %s34
      %s37 = ssub.s32 %s24, %s36
      %s38 = ssub.s32 %s25, %s32
      %s39 = sor.u32 %s37, %s38
      %p40 = scmp.eq.s32.totalorder %s39, 0
      %s42 = sadd.s32 %s41, 1
      %s43 = scalar_select %p40, %s41, %s42
      %p46 = pneg %p40
      %p47 = scmp.eq.s32.totalorder %s17, 1
      %p48 = por %p46, %p47
      %p49 = scmp.ne.s32.totalorder %s41, %s44
      %p50 = scmp.eq.s32.totalorder %s17, 0
      %p51 = por %p49, %p50
      %p52 = scmp.ne.s32.totalorder %s41, %s44
      %p53 = scmp.eq.s32.totalorder %s22, 1
      %p54 = por %p52, %p53
      %p55 = scmp.ne.s32.totalorder %s44, %s45
      %p56 = scmp.eq.s32.totalorder %s22, 0
      %p57 = por %p55, %p56
      %p58 = scmp.ne.s32.totalorder %s44, %s45
      %p59 = scmp.eq.s32.totalorder %s23, 1
      %p60 = por %p58, %p59
      %p62 = scmp.ne.s32.totalorder %s45, %s61
      %p63 = scmp.eq.s32.totalorder %s23, 0
      %p64 = por %p62, %p63
      %s65 = ssub.s32 %s24, %s36
      %p66 = scmp.eq.s32.totalorder %s65, 0
      %s68 = sadd.s32 %s67, 1
      %s69 = scalar_select %p66, %s67, %s68
      %p72 = pneg %p66
      %p73 = scmp.eq.s32.totalorder %s17, 1
      %p74 = por %p72, %p73
      %p75 = scmp.ne.s32.totalorder %s67, %s70
      %p76 = scmp.eq.s32.totalorder %s17, 0
      %p77 = por %p75, %p76
      %p78 = scmp.ne.s32.totalorder %s67, %s70
      %p79 = scmp.eq.s32.totalorder %s22, 1
      %p80 = por %p78, %p79
      %p81 = scmp.ne.s32.totalorder %s70, %s71
      %p82 = scmp.eq.s32.totalorder %s22, 0
      %p83 = por %p81, %p82
      %p84 = scmp.ne.s32.totalorder %s70, %s71
      %p85 = scmp.eq.s32.totalorder %s23, 1
      %p86 = por %p84, %p85
      %p88 = scmp.ne.s32.totalorder %s71, %s87
      %p89 = scmp.eq.s32.totalorder %s23, 0
      %p90 = por %p88, %p89
      %s91 = ssub.s32 %s24, %s36
      %p92 = scmp.eq.s32.totalorder %s91, 0
      %s94 = sadd.s32 %s93, 1
      %s95 = scalar_select %p92, %s93, %s94
      %p98 = pneg %p92
      %p99 = scmp.eq.s32.totalorder %s17, 1
      %p100 = por %p98, %p99
      %p101 = scmp.ne.s32.totalorder %s93, %s96
      %p102 = scmp.eq.s32.totalorder %s17, 0
      %p103 = por %p101, %p102
      %p104 = scmp.ne.s32.totalorder %s93, %s96
      %p105 = scmp.eq.s32.totalorder %s22, 1
      %p106 = por %p104, %p105
      %p107 = scmp.ne.s32.totalorder %s96, %s97
      %p108 = scmp.eq.s32.totalorder %s22, 0
      %p109 = por %p107, %p108
      %p110 = scmp.ne.s32.totalorder %s96, %s97
      %p111 = scmp.eq.s32.totalorder %s23, 1
      %p112 = por %p110, %p111
      %p114 = scmp.ne.s32.totalorder %s97, %s113
      %p115 = scmp.eq.s32.totalorder %s23, 0
      %p116 = por %p114, %p115
      %s117 = ssub.s32 %s24, %s36
      %s118 = ssub.s32 %s25, %s32
      %s119 = sor.u32 %s117, %s118
      %p120 = scmp.eq.s32.totalorder %s119, 0
      %s122 = sadd.s32 %s121, 1
      %s123 = scalar_select %p120, %s121, %s122
      %p126 = pneg %p120
      %p127 = scmp.eq.s32.totalorder %s17, 1
      %p128 = por %p126, %p127
      %p129 = scmp.ne.s32.totalorder %s121, %s124
      %p130 = scmp.eq.s32.totalorder %s17, 0
      %p131 = por %p129, %p130
      %p132 = scmp.ne.s32.totalorder %s121, %s124
      %p133 = scmp.eq.s32.totalorder %s22, 1
      %p134 = por %p132, %p133
      %p135 = scmp.ne.s32.totalorder %s124, %s125
      %p136 = scmp.eq.s32.totalorder %s22, 0
      %p137 = por %p135, %p136
      %p138 = scmp.ne.s32.totalorder %s124, %s125
      %p139 = scmp.eq.s32.totalorder %s23, 1
      %p140 = por %p138, %p139
      %p142 = scmp.ne.s32.totalorder %s125, %s141
      %p143 = scmp.eq.s32.totalorder %s23, 0
      %p144 = por %p142, %p143
      %s145 = ssub.s32 %s24, %s36
      %p146 = scmp.eq.s32.totalorder %s145, 0
      %s148 = sadd.s32 %s147, 1
      %s149 = scalar_select %p146, %s147, %s148
      %p152 = pneg %p146
      %p153 = scmp.eq.s32.totalorder %s17, 1
      %p154 = por %p152, %p153
      %p155 = scmp.ne.s32.totalorder %s147, %s150
      %p156 = scmp.eq.s32.totalorder %s17, 0
      %p157 = por %p155, %p156
      %p158 = scmp.ne.s32.totalorder %s147, %s150
      %p159 = scmp.eq.s32.totalorder %s22, 1
      %p160 = por %p158, %p159
      %p161 = scmp.ne.s32.totalorder %s150, %s151
      %p162 = scmp.eq.s32.totalorder %s22, 0
      %p163 = por %p161, %p162
      %p164 = scmp.ne.s32.totalorder %s150, %s151
      %p165 = scmp.eq.s32.totalorder %s23, 1
      %p166 = por %p164, %p165
      %p168 = scmp.ne.s32.totalorder %s151, %s167
      %p169 = scmp.eq.s32.totalorder %s23, 0
      %p170 = por %p168, %p169
      %p171 = scmp.le.s32.totalorder 1, %s17
      %p172 = scmp.lt.s32.totalorder %s17, 3
      %p173 = pnand %p171, %p172
      %p174 = pneg %p173
      // Predicated region
      $region9: #{tpu_custom_call.1} parent=5 // pred_check
        _
      $region10: #{tpu_custom_call.1} parent=5 // pred_check_branch
        %176 = sbr.rel (%p173) target = $region12
      $region11: #{tpu_custom_call.1} parent=5 // pred_region
        %s177 = ssub.s32 %s17, 1
      $region12: #{tpu_custom_call.1} parent=5 // pred_fallthru
        _
      %p178 = scmp.lt.s32.totalorder %s17, 2
      // Predicated region
      $region13: #{tpu_custom_call.1} parent=5 // pred_check
        %p179 = pneg %p178
      $region14: #{tpu_custom_call.1} parent=5 // pred_check_branch
        %181 = sbr.rel (%p179) target = $region16
      $region15: #{tpu_custom_call.1} parent=5 // pred_region
        // Predicated region
        $region17: #{tpu_custom_call.1} parent=15 // pred_check
          %p182 = pneg %p51
        $region18: #{tpu_custom_call.1} parent=15 // pred_check_branch
          %184 = sbr.rel (%p182) target = $region20
        $region19: #{tpu_custom_call.1} parent=15 // pred_region
          %s185 = smul.u32 2, %s25
          %p186 = scmp.lt.s32.totalorder %s24, 1
          %s187 = scalar_select %p186, %s24, 1
          %p188 = scmp.lt.s32.totalorder %s185, 1
          %s189 = scalar_select %p188, %s185, 1
          %s190 = smul.addr %s187, 2
          %s191 = sadd.s32 %s189, %s190
          %s192 = smul.addr %s191, 8
          %s193 = scalar_lea.vmem %s0, %s192
          %s194 = smul.u32 2, %s25
        $region20: #{tpu_custom_call.1} parent=15 // pred_fallthru
          _
        // Predicated region
        $region21: #{tpu_custom_call.1} parent=15 // pred_check
          %p195 = pneg %p77
        $region22: #{tpu_custom_call.1} parent=15 // pred_check_branch
          %197 = sbr.rel (%p195) target = $region24
        $region23: #{tpu_custom_call.1} parent=15 // pred_region
          %p198 = scmp.lt.s32.totalorder %s24, 1
          %s199 = scalar_select %p198, %s24, 1
          %s200 = smul.addr %s199, 4
          %s201 = smul.addr %s200, 8
          %s202 = scalar_lea.vmem %s1, %s201
        $region24: #{tpu_custom_call.1} parent=15 // pred_fallthru
          _
        // Predicated region
        $region25: #{tpu_custom_call.1} parent=15 // pred_check
          %p203 = pneg %p103
        $region26: #{tpu_custom_call.1} parent=15 // pred_check_branch
          %205 = sbr.rel (%p203) target = $region28
        $region27: #{tpu_custom_call.1} parent=15 // pred_region
          %p206 = scmp.lt.s32.totalorder %s24, 1
          %s207 = scalar_select %p206, %s24, 1
          %s208 = smul.addr %s207, 8
          %s209 = scalar_lea.vmem %s2, %s208
        $region28: #{tpu_custom_call.1} parent=15 // pred_fallthru
          _
      $region16: #{tpu_custom_call.1} parent=5 // pred_fallthru
        _
      %p210 = scmp.le.s32.totalorder 1, %s17
      %p211 = scmp.lt.s32.totalorder %s17, 3
      %p212 = pnand %p210, %p211
      %p213 = pneg %p212
      // Predicated region
      $region29: #{tpu_custom_call.1} parent=5 // pred_check
        _
      $region30: #{tpu_custom_call.1} parent=5 // pred_check_branch
        %215 = sbr.rel (%p212) target = $region32
      $region31: #{tpu_custom_call.1} parent=5 // pred_region
        %s216 = ssub.s32 %s17, 1
        %s217 = smul.u32 2, %s27
        %p218 = scmp.lt.s32.totalorder %s26, 1
        %s219 = scalar_select %p218, %s26, 1
        %p220 = scmp.lt.s32.totalorder %s217, 1
        %s221 = scalar_select %p220, %s217, 1
        %s222 = smul.addr %s219, 2
        %s223 = sadd.s32 %s221, %s222
        %s224 = smul.addr %s223, 8
        %s225 = scalar_lea.vmem %s0, %s224
        %p226 = pneg %p57
        %p227 = pneg %p54
        %p228 = scmp.lt.s32.totalorder %s26, 1
        %s229 = scalar_select %p228, %s26, 1
        %s230 = smul.addr %s229, 4
        %s231 = smul.addr %s230, 8
        %s232 = scalar_lea.vmem %s1, %s231
        %p233 = pneg %p83
        %p234 = pneg %p80
        %p235 = scmp.lt.s32.totalorder %s26, 1
        %s236 = scalar_select %p235, %s26, 1
        %s237 = smul.addr %s236, 8
        %s238 = scalar_lea.vmem %s2, %s237
        %p239 = pneg %p109
        %p240 = pneg %p106
        %p241 = pneg %p137
        %p242 = pneg %p134
        %s243 = sand.u32 %s124, 1
        %s244 = scalar_lea.sflag [#allocation3], %s243
        %s245 = sand.u32 %s124, 1
        %s246 = smul.addr %s245, 16
        %s247 = scalar_lea.vmem [#allocation2], %s246
        %p248 = pneg %p163
        %p249 = pneg %p160
        %s250 = sand.u32 %s150, 1
        %s251 = scalar_lea.sflag [#allocation5], %s250
        %s252 = sand.u32 %s150, 1
        %s253 = scalar_lea.vmem [#allocation4], %s252
        %s254 = smul.u32 2, %s27
        %p255 = scmp.lt.s32.totalorder %s26, 1
        %s256 = scalar_select %p255, %s26, 1
        %p257 = scmp.lt.s32.totalorder %s254, 1
        %s258 = scalar_select %p257, %s254, 1
        %s259 = smul.addr %s256, 2
        %s260 = sadd.s32 %s258, %s259
        %s261 = smul.addr %s260, 8
        %s262 = scalar_lea.vmem %s0, %s261
        %s263 = smul.u32 2, %s27
        %p264 = scmp.lt.s32.totalorder %s26, 1
        %s265 = scalar_select %p264, %s26, 1
        %s266 = smul.addr %s265, 4
        %s267 = smul.addr %s266, 8
        %s268 = scalar_lea.vmem %s1, %s267
        %p269 = scmp.lt.s32.totalorder %s26, 1
        %s270 = scalar_select %p269, %s26, 1
        %s271 = smul.addr %s270, 8
        %s272 = scalar_lea.vmem %s2, %s271
        %s273 = smul.u32 2, %s27
        %v274 = vld [vmem:[%s262] sm:$0xff]
        %v275 = vld [vmem:[%s262 + $0x8] sm:$0xff]
        %v276 = vld [vmem:[%s268] sm:$0xff]
        %v277 = vld [vmem:[%s268 + $0x8] sm:$0xff]
        %v278 = vld [vmem:[%s268 + $0x10] sm:$0xff]
        %v279 = vld [vmem:[%s268 + $0x18] sm:$0xff]
        %vm280 = vcmask 261120
        %v282 = vsel %vm280, %v274, 0
        %v285 = vsel %vm280, %v275, 0
        %287 = vmatprep.subr.mxu0 0.0
        %288 = vmatpush1.msra.mxu0 %v276
        %289 = vmatprep.subr.mxu0 0.0
        %290 = vmatpush1.msra.mxu0 %v277
        %291 = vmatprep.subr.mxu0 0.0
        %292 = vmatpush1.msra.mxu0 %v278
        %293 = vmatprep.subr.mxu0 0.0
        %294 = vmatpush1.msra.mxu0 %v279
        %295 = vmatprep.subr.mxu0 0.0
        %296 = vmatpush1.msra.mxu0 0.0
        %297 = vmatprep.subr.mxu0 0.0
        %298 = vmatpush1.msra.mxu0 0.0
        %299 = vmatprep.subr.mxu0 0.0
        %300 = vmatpush1.msra.mxu0 0.0
        %301 = vmatprep.subr.mxu0 0.0
        %302 = vmatpush1.msra.mxu0 0.0
        %303 = vmatprep.subr.mxu0 0.0
        %304 = vmatpush1.msra.mxu0 0.0
        %305 = vmatprep.subr.mxu0 0.0
        %306 = vmatpush1.msra.mxu0 0.0
        %307 = vmatprep.subr.mxu0 0.0
        %308 = vmatpush1.msra.mxu0 0.0
        %309 = vmatprep.subr.mxu0 0.0
        %310 = vmatpush1.msra.mxu0 0.0
        %311 = vmatprep.subr.mxu0 0.0
        %312 = vmatpush1.msra.mxu0 0.0
        %313 = vmatprep.subr.mxu0 0.0
        %314 = vmatpush1.msra.mxu0 0.0
        %315 = vmatprep.subr.mxu0 0.0
        %316 = vmatpush1.msra.mxu0 0.0
        %317 = vmatprep.subr.mxu0 0.0
        %318 = vmatpush1.msra.mxu0 0.0
        %319 = vmatprep.subr.mxu0 0.0
        %320 = vmatpush1.msra.mxu0 0.0
        %321 = vmatprep.subr.mxu0 0.0
        %322 = vmatpush1.msra.mxu0 0.0
        %323 = vmatprep.subr.mxu0 0.0
        %324 = vmatpush1.msra.mxu0 0.0
        %325 = vmatprep.subr.mxu0 0.0
        %326 = vmatpush1.msra.mxu0 0.0
        %327 = vmatprep.subr.mxu0 0.0
        %328 = vmatpush1.msra.mxu0 0.0
        %329 = vmatprep.subr.mxu0 0.0
        %330 = vmatpush1.msra.mxu0 0.0
        %331 = vmatprep.subr.mxu0 0.0
        %332 = vmatpush1.msra.mxu0 0.0
        %333 = vmatprep.subr.mxu0 0.0
        %334 = vmatpush1.msra.mxu0 0.0
        %335 = vmatprep.subr.mxu0 0.0
        %336 = vmatpush1.msra.mxu0 0.0
        %337 = vmatprep.subr.mxu0 0.0
        %338 = vmatpush1.msra.mxu0 0.0
        %339 = vmatprep.subr.mxu0 0.0
        %340 = vmatpush1.msra.mxu0 0.0
        %341 = vmatprep.subr.mxu0 0.0
        %342 = vmatpush1.msra.mxu0 0.0
        %343 = vmatprep.subr.mxu0 0.0
        %344 = vmatpush1.msra.mxu0 0.0
        %345 = vmatprep.subr.mxu0 0.0
        %346 = vmatpush1.msra.mxu0 0.0
        %347 = vmatprep.subr.mxu0 0.0
        %348 = vmatpush1.msra.mxu0 0.0
        %349 = vmatprep.subr.mxu0 0.0
        %350 = vmatpush1.msra.mxu0 0.0
        %351 = vmatprep.mubr.f32.mxu0 0.0
        %352 = vmatmul.mubr.f32.gmra.mrb[0].mxu0 %v282
        %v353 = vpop.f32.mrb[0].mxu0
        %v354 = vadd.f32 0.0, %v353
        %v355 = vpop.f32.mrb[0].mxu0
        %356 = vmatprep.mubr.f32.mxu0 0.0
        %357 = vmatmul.mubr.f32.gmra.mrb[0].mxu0 %v285
        %v358 = vpop.f32.mrb[0].mxu0
        %v359 = vadd.f32 0.0, %v358
        %v360 = vpop.f32.mrb[0].mxu0
        %361 = vdwg.mxu0
        %v362 = vld [vmem:[%s272] sm:$0xff]
        %vm363 = vcmask 64512
        %v365 = vsel %vm363, %v354, 0
        %v368 = vsel %vm363, %v359, 0
        %370 = vmatprep.subr.mxu0 0.0
        %371 = vmatpush1.msra.mxu0 %v362
        %372 = vmatprep.subr.mxu0 0.0
        %373 = vmatpush1.msra.mxu0 0.0
        %374 = vmatprep.subr.mxu0 0.0
        %375 = vmatpush1.msra.mxu0 0.0
        %376 = vmatprep.subr.mxu0 0.0
        %377 = vmatpush1.msra.mxu0 0.0
        %378 = vmatprep.subr.mxu0 0.0
        %379 = vmatpush1.msra.mxu0 0.0
        %380 = vmatprep.subr.mxu0 0.0
        %381 = vmatpush1.msra.mxu0 0.0
        %382 = vmatprep.subr.mxu0 0.0
        %383 = vmatpush1.msra.mxu0 0.0
        %384 = vmatprep.subr.mxu0 0.0
        %385 = vmatpush1.msra.mxu0 0.0
        %386 = vmatprep.subr.mxu0 0.0
        %387 = vmatpush1.msra.mxu0 0.0
        %388 = vmatprep.subr.mxu0 0.0
        %389 = vmatpush1.msra.mxu0 0.0
        %390 = vmatprep.subr.mxu0 0.0
        %391 = vmatpush1.msra.mxu0 0.0
        %392 = vmatprep.subr.mxu0 0.0
        %393 = vmatpush1.msra.mxu0 0.0
        %394 = vmatprep.subr.mxu0 0.0
        %395 = vmatpush1.msra.mxu0 0.0
        %396 = vmatprep.subr.mxu0 0.0
        %397 = vmatpush1.msra.mxu0 0.0
        %398 = vmatprep.subr.mxu0 0.0
        %399 = vmatpush1.msra.mxu0 0.0
        %400 = vmatprep.subr.mxu0 0.0
        %401 = vmatpush1.msra.mxu0 0.0
        %402 = vmatprep.subr.mxu0 0.0
        %403 = vmatpush1.msra.mxu0 0.0
        %404 = vmatprep.subr.mxu0 0.0
        %405 = vmatpush1.msra.mxu0 0.0
        %406 = vmatprep.subr.mxu0 0.0
        %407 = vmatpush1.msra.mxu0 0.0
        %408 = vmatprep.subr.mxu0 0.0
        %409 = vmatpush1.msra.mxu0 0.0
        %410 = vmatprep.subr.mxu0 0.0
        %411 = vmatpush1.msra.mxu0 0.0
        %412 = vmatprep.subr.mxu0 0.0
        %413 = vmatpush1.msra.mxu0 0.0
        %414 = vmatprep.subr.mxu0 0.0
        %415 = vmatpush1.msra.mxu0 0.0
        %416 = vmatprep.subr.mxu0 0.0
        %417 = vmatpush1.msra.mxu0 0.0
        %418 = vmatprep.subr.mxu0 0.0
        %419 = vmatpush1.msra.mxu0 0.0
        %420 = vmatprep.subr.mxu0 0.0
        %421 = vmatpush1.msra.mxu0 0.0
        %422 = vmatprep.subr.mxu0 0.0
        %423 = vmatpush1.msra.mxu0 0.0
        %424 = vmatprep.subr.mxu0 0.0
        %425 = vmatpush1.msra.mxu0 0.0
        %426 = vmatprep.subr.mxu0 0.0
        %427 = vmatpush1.msra.mxu0 0.0
        %428 = vmatprep.subr.mxu0 0.0
        %429 = vmatpush1.msra.mxu0 0.0
        %430 = vmatprep.subr.mxu0 0.0
        %431 = vmatpush1.msra.mxu0 0.0
        %432 = vmatprep.subr.mxu0 0.0
        %433 = vmatpush1.msra.mxu0 0.0
        %434 = vmatprep.mubr.f32.mxu0 0.0
        %435 = vmatmul.mubr.f32.gmra.mrb[0].mxu0 %v365
        %v436 = vpop.f32.mrb[0].mxu0
        %v437 = vadd.f32 0.0, %v436
        %v438 = vpop.f32.mrb[0].mxu0
        %439 = vmatprep.mubr.f32.mxu0 0.0
        %440 = vmatmul.mubr.f32.gmra.mrb[0].mxu0 %v368
        %v441 = vpop.f32.mrb[0].mxu0
        %v442 = vadd.f32 0.0, %v441
        %v443 = vpop.f32.mrb[0].mxu0
        %444 = vdwg.mxu0
        %v445 = vadd.f32 %v274, %v437
        %v446 = vadd.f32 %v275, %v442
        %447 = vst.msk [vmem:[%s247] sm:$0xff] %vm280, %v445
        %448 = vst.msk [vmem:[%s247 + $0x8] sm:$0xff] %vm280, %v446
        %v449 = vsel %vm280, %v274, 0.0
        %v450 = vsel %vm280, %v275, 0.0
        %v451 = vadd.f32 %v449, %v450
        %v452 = vrot.slane %v451, 4
        %v453 = vadd.f32 %v451, %v452
        %v454 = vrot.slane %v453, 2
        %v455 = vadd.f32 %v453, %v454
        %v456 = vrot.slane %v455, 1
        %v457 = vadd.f32 %v455, %v456
        %p458 = scmp.eq.s32.totalorder %s27, 0
        // Predicated region
        $region33: #{tpu_custom_call.1} parent=31 // pred_check
          %p459 = pneg %p458
        $region34: #{tpu_custom_call.1} parent=31 // pred_check_branch
          %461 = sbr.rel (%p459) target = $region36
        $region35: #{tpu_custom_call.1} parent=31 // pred_region
          %vm462 = vcmask 253952
          %463 = vst.msk [vmem:[%s253] sm:$0x1] %vm462, 0.0
        $region36: #{tpu_custom_call.1} parent=31 // pred_fallthru
          _
        %v464 = vld [vmem:[%s253] sm:$0x1]
        %v465 = vadd.f32 %v464, %v457
        %vm466 = vcmask 253952
        %467 = vst.msk [vmem:[%s253] sm:$0x1] %vm466, %v465
        // Predicated region
        $region37: #{tpu_custom_call.1} parent=31 // pred_check
          %p468 = pneg %p458
        $region38: #{tpu_custom_call.1} parent=31 // pred_check_branch
          %470 = sbr.rel (%p468) target = $region40
        $region39: #{tpu_custom_call.1} parent=31 // pred_region
          %v471 = vld [vmem:[%s253] sm:$0x1]
          %v472 = vmul.f32 %v471, 0.0625
          %473 = vst.msk [vmem:[%s253] sm:$0x1] %vm466, %v472
        $region40: #{tpu_custom_call.1} parent=31 // pred_fallthru
          _
        %s474 = sand.u32 %s124, 1
        %s475 = scalar_lea.sflag [#allocation3], %s474
        %s476 = sand.u32 %s124, 1
        %s477 = smul.addr %s476, 16
        %s478 = scalar_lea.vmem [#allocation2], %s477
        %s479 = sand.u32 %s150, 1
        %s480 = scalar_lea.sflag [#allocation5], %s479
        %s481 = sand.u32 %s150, 1
        %s482 = scalar_lea.vmem [#allocation4], %s481
        // Predicated region
        $region41: #{tpu_custom_call.1} parent=31 // pred_check
          %p483 = pneg %p134
        $region42: #{tpu_custom_call.1} parent=31 // pred_check_branch
          %485 = sbr.rel (%p483) target = $region44
        $region43: #{tpu_custom_call.1} parent=31 // pred_region
          %s486 = smul.u32 2, %s27
          %s488 = ssub.s32 256, 256
          %489 = vsyncadd %s475, %s488
          %s490 = smul.addr %s26, 2
          %s491 = sadd.s32 %s486, %s490
          %s492 = smul.addr %s491, 128
          %s493 = scalar_lea.hbm %s3, %s492
          %s494 = sshll.u32 %s478, 4
          %s495 = int_to_ptr.vmem [resolvable:$true] %s494
          %500 = dma.vmem_to_hbm [thread:$0]  %s495, 256, %s493, %s475, 128, 128, 8
        $region44: #{tpu_custom_call.1} parent=31 // pred_fallthru
          _
        // Predicated region
        $region45: #{tpu_custom_call.1} parent=31 // pred_check
          %p501 = pneg %p160
        $region46: #{tpu_custom_call.1} parent=31 // pred_check_branch
          %503 = sbr.rel (%p501) target = $region48
        $region47: #{tpu_custom_call.1} parent=31 // pred_region
          %s505 = ssub.s32 16, 16
          %506 = vsyncadd %s480, %s505
          %s507 = smul.addr %s26, 16
          %s508 = scalar_lea.hbm %s4, %s507
          %s510 = sshll.u32 %s482, 4
          %s511 = int_to_ptr.vmem [resolvable:$true] %s510
          %513 = dma.vmem_to_hbm [thread:$0]  %s511, 16, %s508, %s480
        $region48: #{tpu_custom_call.1} parent=31 // pred_fallthru
          _
      $region32: #{tpu_custom_call.1} parent=5 // pred_fallthru
        _
      %p514 = scmp.le.s32.totalorder 2, %s17
      // Predicated region
      $region49: #{tpu_custom_call.1} parent=5 // pred_check
        %p515 = pneg %p514
      $region50: #{tpu_custom_call.1} parent=5 // pred_check_branch
        %517 = sbr.rel (%p515) target = $region52
      $region51: #{tpu_custom_call.1} parent=5 // pred_region
        %s518 = ssub.s32 %s17, 2
        // Predicated region
        $region53: #{tpu_custom_call.1} parent=51 // pred_check
          %p519 = pneg %p140
        $region54: #{tpu_custom_call.1} parent=51 // pred_check_branch
          %521 = sbr.rel (%p519) target = $region56
        $region55: #{tpu_custom_call.1} parent=51 // pred_region
          %s522 = sand.u32 %s125, 1
          %s523 = scalar_lea.sflag [#allocation3], %s522
          %s524 = sand.u32 %s125, 1
          %s525 = smul.addr %s524, 16
          %s526 = scalar_lea.vmem [#allocation2], %s525
          %527 = dma.done %s523, 256
        $region56: #{tpu_custom_call.1} parent=51 // pred_fallthru
          _
        // Predicated region
        $region57: #{tpu_custom_call.1} parent=51 // pred_check
          %p528 = pneg %p166
        $region58: #{tpu_custom_call.1} parent=51 // pred_check_branch
          %530 = sbr.rel (%p528) target = $region60
        $region59: #{tpu_custom_call.1} parent=51 // pred_region
          %s531 = sand.u32 %s151, 1
          %s532 = scalar_lea.sflag [#allocation5], %s531
          %s533 = sand.u32 %s151, 1
          %s534 = scalar_lea.vmem [#allocation4], %s533
          %535 = dma.done %s532, 16
        $region60: #{tpu_custom_call.1} parent=51 // pred_fallthru
          _
      $region52: #{tpu_custom_call.1} parent=5 // pred_fallthru
        _
    $region6: #{tpu_custom_call.1} parent=1 // loop_footer
      %s21 = sadd.s32 1, %s17
    $region7: #{tpu_custom_call.1} parent=1 // loop_footer_branch
      %16 = sbr.rel target = $region3
    $region8: #{tpu_custom_call.1} parent=1 // loop_exit
      _
    %536 = vsyncpa [#allocation3], 1
    %s537 = scalar_lea.sflag [#allocation3], 1
    %538 = vsyncpa %s537, 1
    %539 = vsyncpa [#allocation5], 1
    %s540 = scalar_lea.sflag [#allocation5], 1
    %541 = vsyncpa %s540, 1

</llo_original>
